<compile_context>
chip_gen: v5e
topology: v5e:2x2
jax: 0.10.0
libtpu: 0.0.40
codegen_flags: <defaults>
</compile_context>

<pallas_src>
import jax
import jax.numpy as jnp
from jax.experimental import pallas as pl
from jax.experimental.pallas import tpu as pltpu


def _round_up(n: int, m: int) -> int:
    return ((n + m - 1) // m) * m


def _value_kernel(x_ref, w1_ref, b1_ref, w2_ref, b2_ref, w3_ref, b3_ref, out_ref):
    # x_ref:  (TILE_B, S)   state tile (f32 or bf16)
    # w1_ref: (S, H)   b1_ref: (1, H)
    # w2_ref: (H, H)   b2_ref: (1, H)
    # w3_ref: (1, H)   b3_ref: (1, 1)      (value head as a row)
    # out_ref: (TILE_B, 1) f32
    x = x_ref[...]

    # Layer 1: MXU matmul (bf16 or f32 operands), f32 accumulate; bias + tanh in f32.
    h1 = jnp.tanh(
        jnp.dot(x, w1_ref[...], preferred_element_type=jnp.float32) + b1_ref[...]
    )
    # Layer 2: cast activation back to the weight dtype for the MXU, accumulate f32.
    h2 = jnp.tanh(
        jnp.dot(h1.astype(w2_ref.dtype), w2_ref[...],
                preferred_element_type=jnp.float32) + b2_ref[...]
    )
    # Value head (H -> 1): VPU multiply + lane reduction instead of an N=1 MXU pass.
    v = jnp.sum(h2 * w3_ref[...], axis=-1, keepdims=True) + b3_ref[...]
    out_ref[...] = v.astype(out_ref.dtype)


def value_forward(state, params, *, tile_b=512):
    """state: (B, state_dim) -> (B,) f32 value estimates (squeezed head)."""
    w1, b1, w2, b2, w3, b3 = params
    B, S = state.shape

    # Tile the batch; don't over-pad tiny batches. Keep the sublane dim a multiple of 8.
    tile_b = max(8, min(int(tile_b), _round_up(B, 8)))
    tile_b = _round_up(tile_b, 8)
    B_pad = _round_up(B, tile_b)

    # Stream the state in the matmul dtype (halves HBM bytes when weights are bf16).
    x = state.astype(w1.dtype)
    if B_pad != B:
        x = jnp.pad(x, ((0, B_pad - B), (0, 0)))

    grid = (B_pad // tile_b,)

    def _resident(shape):
        # Constant block index -> DMA'd once, stays resident in VMEM across the grid.
        return pl.BlockSpec(shape, lambda i: (0, 0))

    out = pl.pallas_call(
        _value_kernel,
        out_shape=jax.ShapeDtypeStruct((B_pad, 1), jnp.float32),
        grid=grid,
        in_specs=[
            pl.BlockSpec((tile_b, S), lambda i: (i, 0)),   # state tile (pipelined)
            _resident(w1.shape), _resident(b1.shape),
            _resident(w2.shape), _resident(b2.shape),
            _resident(w3.shape), _resident(b3.shape),
        ],
        out_specs=pl.BlockSpec((tile_b, 1), lambda i: (i, 0)),
        compiler_params=pltpu.CompilerParams(
            dimension_semantics=("parallel",),          # megacore split on v7x
            vmem_limit_bytes=32 * 1024 * 1024,          # safe on v5e/v6e/v7x budgets
        ),
    )(x, w1, b1, w2, b2, w3, b3)

    # .squeeze(-1) of the PyTorch forward + drop batch padding (glue, outside kernel).
    return out[:B, 0]


def init_params(key, state_dim, hidden_dim=128, dtype=jnp.float32):
    """nn.Linear-style init (uniform +/- 1/sqrt(fan_in)); weights stored (in, out).
    Value head weight scaled by 0.1 and stored as a (1, H) row; head bias zeroed,
    matching Value.__init__."""
    ks = jax.random.split(key, 6)

    def lin(kw, kb, fan_in, fan_out):
        bound = 1.0 / (float(fan_in) ** 0.5)
        w = jax.random.uniform(kw, (fan_in, fan_out), dtype, -bound, bound)
        b = jax.random.uniform(kb, (1, fan_out), dtype, -bound, bound)
        return w, b

    w1, b1 = lin(ks[0], ks[1], state_dim, hidden_dim)
    w2, b2 = lin(ks[2], ks[3], hidden_dim, hidden_dim)
    w3, b3 = lin(ks[4], ks[5], hidden_dim, 1)
    w3_row = (w3 * 0.1).T           # (1, H): value_head.weight.data.mul_(0.1)
    b3 = b3 * 0.0                   # (1, 1): value_head.bias.data.mul_(0.0)
    return (w1, b1, w2, b2, w3_row, b3)


def cast_matmul_weights(params, dtype=jnp.bfloat16):
    """Cast only the MXU operands (w1, w2) to low precision; biases, the head row and
    everything around tanh stay f32 (v5e has no bf16 VPU/EUP path)."""
    w1, b1, w2, b2, w3, b3 = params
    return (w1.astype(dtype), b1, w2.astype(dtype), b2, w3, b3)


def value_reference(state, params):
    """Pure-JAX f32 reference for correctness check."""
    w1, b1, w2, b2, w3, b3 = params
    f32 = jnp.float32
    hp = jax.lax.Precision.HIGHEST
    x = state.astype(f32)
    x = jnp.tanh(jnp.dot(x, w1.astype(f32), precision=hp) + b1.astype(f32))
    x = jnp.tanh(jnp.dot(x, w2.astype(f32), precision=hp) + b2.astype(f32))
    v = jnp.sum(x * w3.astype(f32), axis=-1, keepdims=True) + b3.astype(f32)
    return v[:, 0]


if __name__ == "__main__":
    STATE_DIM, HIDDEN = 16, 128
    B = 300  # deliberately not a multiple of the tile -> exercises padding + 3-step grid

    key = jax.random.PRNGKey(0)
    k_state, k_params = jax.random.split(key)

    state = jax.random.normal(k_state, (B, STATE_DIM), jnp.float32)
    params_f32 = init_params(k_params, STATE_DIM, HIDDEN)
    ref = value_reference(state, params_f32)

    # f32 weights path (numerically close to the reference).
    out_f32 = jax.block_until_ready(value_forward(state, params_f32, tile_b=128))
    assert out_f32.shape == (B,), out_f32.shape
    assert jnp.allclose(out_f32, ref, atol=5e-3, rtol=5e-3), (out_f32, ref)

    # bf16 matmul path (MXU-native on v5e/v6e/v7x; f32 accumulate + f32 tanh).
    params_bf16 = cast_matmul_weights(params_f32, jnp.bfloat16)
    out_bf16 = jax.block_until_ready(value_forward(state, params_bf16, tile_b=128))
    assert out_bf16.shape == (B,), out_bf16.shape
    assert jnp.allclose(out_bf16, ref, atol=2e-2, rtol=2e-2), (out_bf16, ref)

    # NOTE: for the tiny-batch RL inference case (B ~ 8), launch overhead dominates —
    # batch rollout timesteps or fuse this head with the Policy MLP before shipping.
    print("KERNEL_OK")
</pallas_src>

<mosaic_0001>
module attributes {stable_mosaic.version = 11 : i64} {
  func.func @_value_kernel(%arg0: i32, %arg1: memref<128x16xf32, #tpu.memory_space<vmem>>, %arg2: memref<16x128xf32, #tpu.memory_space<vmem>>, %arg3: memref<1x128xf32, #tpu.memory_space<vmem>>, %arg4: memref<128x128xf32, #tpu.memory_space<vmem>>, %arg5: memref<1x128xf32, #tpu.memory_space<vmem>>, %arg6: memref<1x128xf32, #tpu.memory_space<vmem>>, %arg7: memref<1x1xf32, #tpu.memory_space<vmem>>, %arg8: memref<128x1xf32, #tpu.memory_space<vmem>>) attributes {dimension_semantics = [#tpu.dimension_semantics<parallel>], iteration_bounds = array<i64: 3>, scalar_prefetch = 0 : i64, scratch_operands = 0 : i64, tpu.core_type = #tpu.core_type<tc>, window_params = [{transform_indices = @transform_0, window_bounds = array<i64: 128, 16>}, {pipeline_mode = #tpu.pipeline_mode<synchronous>, transform_indices = @transform_1, window_bounds = array<i64: 16, 128>}, {pipeline_mode = #tpu.pipeline_mode<synchronous>, transform_indices = @transform_2, window_bounds = array<i64: 1, 128>}, {pipeline_mode = #tpu.pipeline_mode<synchronous>, transform_indices = @transform_3, window_bounds = array<i64: 128, 128>}, {pipeline_mode = #tpu.pipeline_mode<synchronous>, transform_indices = @transform_4, window_bounds = array<i64: 1, 128>}, {pipeline_mode = #tpu.pipeline_mode<synchronous>, transform_indices = @transform_5, window_bounds = array<i64: 1, 128>}, {pipeline_mode = #tpu.pipeline_mode<synchronous>, transform_indices = @transform_6, window_bounds = array<i64: 1, 1>}, {transform_indices = @transform_7, window_bounds = array<i64: 128, 1>}]} {
    %c0 = arith.constant 0 : index
    %c0_0 = arith.constant 0 : index
    %0 = vector.load %arg1[%c0, %c0_0] : memref<128x16xf32, #tpu.memory_space<vmem>>, vector<128x16xf32>
    %c0_1 = arith.constant 0 : index
    %c0_2 = arith.constant 0 : index
    %1 = vector.load %arg2[%c0_1, %c0_2] : memref<16x128xf32, #tpu.memory_space<vmem>>, vector<16x128xf32>
    %cst = arith.constant dense<0.000000e+00> : vector<128x128xf32>
    %2 = tpu.matmul %0, %1, %cst {dimension_numbers = #tpu.dot_dimension_numbers<[1], [0], [0], [1], [0, 0, 1, 1], [], []>} : vector<128x16xf32>, vector<16x128xf32>, vector<128x128xf32> -> vector<128x128xf32>
    %c0_3 = arith.constant 0 : index
    %c0_4 = arith.constant 0 : index
    %3 = vector.load %arg3[%c0_3, %c0_4] : memref<1x128xf32, #tpu.memory_space<vmem>>, vector<1x128xf32>
    %4 = vector.broadcast %3 : vector<1x128xf32> to vector<128x128xf32>
    %5 = arith.addf %2, %4 : vector<128x128xf32>
    %6 = math.tanh %5 : vector<128x128xf32>
    %c0_5 = arith.constant 0 : index
    %c0_6 = arith.constant 0 : index
    %7 = vector.load %arg4[%c0_5, %c0_6] : memref<128x128xf32, #tpu.memory_space<vmem>>, vector<128x128xf32>
    %cst_7 = arith.constant dense<0.000000e+00> : vector<128x128xf32>
    %8 = tpu.matmul %6, %7, %cst_7 {dimension_numbers = #tpu.dot_dimension_numbers<[1], [0], [0], [1], [0, 0, 1, 1], [], []>} : vector<128x128xf32>, vector<128x128xf32>, vector<128x128xf32> -> vector<128x128xf32>
    %c0_8 = arith.constant 0 : index
    %c0_9 = arith.constant 0 : index
    %9 = vector.load %arg5[%c0_8, %c0_9] : memref<1x128xf32, #tpu.memory_space<vmem>>, vector<1x128xf32>
    %10 = vector.broadcast %9 : vector<1x128xf32> to vector<128x128xf32>
    %11 = arith.addf %8, %10 : vector<128x128xf32>
    %12 = math.tanh %11 : vector<128x128xf32>
    %c0_10 = arith.constant 0 : index
    %c0_11 = arith.constant 0 : index
    %13 = vector.load %arg6[%c0_10, %c0_11] : memref<1x128xf32, #tpu.memory_space<vmem>>, vector<1x128xf32>
    %14 = vector.broadcast %13 : vector<1x128xf32> to vector<128x128xf32>
    %15 = arith.mulf %12, %14 : vector<128x128xf32>
    %cst_12 = arith.constant dense<0.000000e+00> : vector<128xf32>
    %16 = vector.multi_reduction <add>, %15, %cst_12 [1] : vector<128x128xf32> to vector<128xf32>
    %17 = vector.shape_cast %16 : vector<128xf32> to vector<128x1xf32>
    %c0_13 = arith.constant 0 : index
    %c0_14 = arith.constant 0 : index
    %18 = vector.load %arg7[%c0_13, %c0_14] : memref<1x1xf32, #tpu.memory_space<vmem>>, vector<1x1xf32>
    %19 = vector.broadcast %18 : vector<1x1xf32> to vector<128x1xf32>
    %20 = arith.addf %17, %19 : vector<128x1xf32>
    %c0_15 = arith.constant 0 : index
    %c0_16 = arith.constant 0 : index
    %21 = vector.load %arg8[%c0_15, %c0_16] : memref<128x1xf32, #tpu.memory_space<vmem>>, vector<128x1xf32>
    tpu.vector_store %arg8[%c0_15, %c0_16], %20 {strides = array<i32>} : memref<128x1xf32, #tpu.memory_space<vmem>>, vector<128x1xf32>,
    return
  }
  func.func @transform_0(%arg0: i32) -> (i32, i32) {
    %c0_i32 = arith.constant 0 : i32
    %c0_i32_0 = arith.constant 0 : i32
    return %arg0, %c0_i32 : i32, i32
  }
  func.func @transform_1(%arg0: i32) -> (i32, i32) {
    %c0_i32 = arith.constant 0 : i32
    %c0_i32_0 = arith.constant 0 : i32
    %c0_i32_1 = arith.constant 0 : i32
    return %c0_i32, %c0_i32_0 : i32, i32
  }
  func.func @transform_2(%arg0: i32) -> (i32, i32) {
    %c0_i32 = arith.constant 0 : i32
    %c0_i32_0 = arith.constant 0 : i32
    %c0_i32_1 = arith.constant 0 : i32
    return %c0_i32, %c0_i32_0 : i32, i32
  }
  func.func @transform_3(%arg0: i32) -> (i32, i32) {
    %c0_i32 = arith.constant 0 : i32
    %c0_i32_0 = arith.constant 0 : i32
    %c0_i32_1 = arith.constant 0 : i32
    return %c0_i32, %c0_i32_0 : i32, i32
  }
  func.func @transform_4(%arg0: i32) -> (i32, i32) {
    %c0_i32 = arith.constant 0 : i32
    %c0_i32_0 = arith.constant 0 : i32
    %c0_i32_1 = arith.constant 0 : i32
    return %c0_i32, %c0_i32_0 : i32, i32
  }
  func.func @transform_5(%arg0: i32) -> (i32, i32) {
    %c0_i32 = arith.constant 0 : i32
    %c0_i32_0 = arith.constant 0 : i32
    %c0_i32_1 = arith.constant 0 : i32
    return %c0_i32, %c0_i32_0 : i32, i32
  }
  func.func @transform_6(%arg0: i32) -> (i32, i32) {
    %c0_i32 = arith.constant 0 : i32
    %c0_i32_0 = arith.constant 0 : i32
    %c0_i32_1 = arith.constant 0 : i32
    return %c0_i32, %c0_i32_0 : i32, i32
  }
  func.func @transform_7(%arg0: i32) -> (i32, i32) {
    %c0_i32 = arith.constant 0 : i32
    %c0_i32_0 = arith.constant 0 : i32
    return %arg0, %c0_i32 : i32, i32
  }
}

</mosaic_0001>

<llo_original>
// kernel: tpu_custom_call.1
$region0: #{tpu_custom_call.1}
  #allocation0 [shape = 'u32[]', space=smem, size = 0x4, offset = 0x4, fixed_abs, tag = 'smem constant byte address 0x4 - core index']
  #allocation1 [shape = 'u32[72,128]{1,0:T(1,128)}', space=vmem, size = 0x9000, scoped, tag = 'internal scratch']
  #allocation2 [shape = 'f32[1,1]{1,0:T(1,128)S(1)}', space=vmem, size = 0x200, scoped, tag = 'scoped memory for tpu_custom_call.1']
  %s0 = inlined_call_operand.vmem [shape: f32[384,16], index: 0, kind: input, shape index: {}]
  %s1 = inlined_call_operand.vmem [shape: f32[16,128], index: 1, kind: input, shape index: {}]
  %s2 = inlined_call_operand.vmem [shape: f32[1,128], index: 2, kind: input, shape index: {}]
  %s3 = inlined_call_operand.vmem [shape: f32[128,128], index: 3, kind: input, shape index: {}]
  %s4 = inlined_call_operand.vmem [shape: f32[1,128], index: 4, kind: input, shape index: {}]
  %s5 = inlined_call_operand.vmem [shape: f32[1,128], index: 5, kind: input, shape index: {}]
  %s6 = inlined_call_operand.<no memory space> [shape: f32[1,1], index: 6, kind: input, shape index: {}]
  %s7 = inlined_call_operand.vmem [shape: f32[384,1], index: 7, kind: output, shape index: {}]
  %s8 = sld [smem:[#allocation0]]
  $region61: #{tpu_custom_call.1} parent=0
    _
  %s10 = ssub.s32 1, %s8
  %s11 = scalar_select 0, %s10, %s8
  %v12 = vstv %s6
  %13 = vst [vmem:[#allocation2] sm:$0x1] %v12
  loop: start=0, step=1, limit=5
  $region2: #{tpu_custom_call.1} parent=0 // loop_pre_header
    _
  $region3: #{tpu_custom_call.1} parent=0 // loop_header
    %s15 = sphi 0, %s19
    %p16 = scmp.ge.s32.totalorder %s15, 5
    %s25 = sphi 0, %s27
    %s28 = sphi 0, %s25
    %s29 = sphi 0, %s28
    %s45 = sphi 0, %s29
    %s49 = sphi 0, %s49
    %s51 = sphi 0, %s49
    %s52 = sphi 0, %s51
    %s66 = sphi 0, %s52
    %s70 = sphi 0, %s70
    %s72 = sphi 0, %s70
    %s73 = sphi 0, %s72
    %s87 = sphi 0, %s73
    %s91 = sphi 0, %s91
    %s93 = sphi 0, %s91
    %s94 = sphi 0, %s93
    %s108 = sphi 0, %s94
    %s112 = sphi 0, %s112
    %s114 = sphi 0, %s112
    %s115 = sphi 0, %s114
    %s129 = sphi 0, %s115
    %s133 = sphi 0, %s133
    %s135 = sphi 0, %s133
    %s136 = sphi 0, %s135
    %s150 = sphi 0, %s136
    %s154 = sphi 0, %s154
    %s156 = sphi 0, %s154
    %s157 = sphi 0, %s156
    %s171 = sphi 0, %s157
    %s177 = sphi 0, %s179
    %s180 = sphi 0, %s177
    %s181 = sphi 0, %s180
    %s197 = sphi 0, %s181
  $region4: #{tpu_custom_call.1} parent=0 // loop_header_branch
    %18 = sbr.rel (%p16) target = $region8
  $region5: #{tpu_custom_call.1} parent=0 // loop_body
    %s20 = ssub.s32 %s15, 1
    %s21 = ssub.s32 %s15, 2
    %s22 = sadd.s32 %s15, 1
    %s23 = ssub.s32 %s15, %s22
    %p24 = scmp.eq.s32.totalorder %s23, 0
    %s26 = sadd.s32 %s25, 1
    %s27 = scalar_select %p24, %s25, %s26
    %p30 = pneg %p24
    %p31 = scmp.eq.s32.totalorder %s15, 2
    %p32 = por %p30, %p31
    %p33 = scmp.ne.s32.totalorder %s25, %s28
    %p34 = scmp.eq.s32.totalorder %s15, 0
    %p35 = por %p33, %p34
    %p36 = scmp.ne.s32.totalorder %s25, %s28
    %p37 = scmp.eq.s32.totalorder %s20, 2
    %p38 = por %p36, %p37
    %p39 = scmp.ne.s32.totalorder %s28, %s29
    %p40 = scmp.eq.s32.totalorder %s20, 0
    %p41 = por %p39, %p40
    %p42 = scmp.ne.s32.totalorder %s28, %s29
    %p43 = scmp.eq.s32.totalorder %s21, 2
    %p44 = por %p42, %p43
    %p46 = scmp.ne.s32.totalorder %s29, %s45
    %p47 = scmp.eq.s32.totalorder %s21, 0
    %p48 = por %p46, %p47
    %s50 = sadd.s32 %s49, 1
    %p53 = scmp.eq.s32.totalorder %s15, 2
    %p54 = scmp.ne.s32.totalorder %s49, %s51
    %p55 = scmp.eq.s32.totalorder %s15, 0
    %p56 = por %p54, %p55
    %p57 = scmp.ne.s32.totalorder %s49, %s51
    %p58 = scmp.eq.s32.totalorder %s20, 2
    %p59 = por %p57, %p58
    %p60 = scmp.ne.s32.totalorder %s51, %s52
    %p61 = scmp.eq.s32.totalorder %s20, 0
    %p62 = por %p60, %p61
    %p63 = scmp.ne.s32.totalorder %s51, %s52
    %p64 = scmp.eq.s32.totalorder %s21, 2
    %p65 = por %p63, %p64
    %p67 = scmp.ne.s32.totalorder %s52, %s66
    %p68 = scmp.eq.s32.totalorder %s21, 0
    %p69 = por %p67, %p68
    %s71 = sadd.s32 %s70, 1
    %p74 = scmp.eq.s32.totalorder %s15, 2
    %p75 = scmp.ne.s32.totalorder %s70, %s72
    %p76 = scmp.eq.s32.totalorder %s15, 0
    %p77 = por %p75, %p76
    %p78 = scmp.ne.s32.totalorder %s70, %s72
    %p79 = scmp.eq.s32.totalorder %s20, 2
    %p80 = por %p78, %p79
    %p81 = scmp.ne.s32.totalorder %s72, %s73
    %p82 = scmp.eq.s32.totalorder %s20, 0
    %p83 = por %p81, %p82
    %p84 = scmp.ne.s32.totalorder %s72, %s73
    %p85 = scmp.eq.s32.totalorder %s21, 2
    %p86 = por %p84, %p85
    %p88 = scmp.ne.s32.totalorder %s73, %s87
    %p89 = scmp.eq.s32.totalorder %s21, 0
    %p90 = por %p88, %p89
    %s92 = sadd.s32 %s91, 1
    %p95 = scmp.eq.s32.totalorder %s15, 2
    %p96 = scmp.ne.s32.totalorder %s91, %s93
    %p97 = scmp.eq.s32.totalorder %s15, 0
    %p98 = por %p96, %p97
    %p99 = scmp.ne.s32.totalorder %s91, %s93
    %p100 = scmp.eq.s32.totalorder %s20, 2
    %p101 = por %p99, %p100
    %p102 = scmp.ne.s32.totalorder %s93, %s94
    %p103 = scmp.eq.s32.totalorder %s20, 0
    %p104 = por %p102, %p103
    %p105 = scmp.ne.s32.totalorder %s93, %s94
    %p106 = scmp.eq.s32.totalorder %s21, 2
    %p107 = por %p105, %p106
    %p109 = scmp.ne.s32.totalorder %s94, %s108
    %p110 = scmp.eq.s32.totalorder %s21, 0
    %p111 = por %p109, %p110
    %s113 = sadd.s32 %s112, 1
    %p116 = scmp.eq.s32.totalorder %s15, 2
    %p117 = scmp.ne.s32.totalorder %s112, %s114
    %p118 = scmp.eq.s32.totalorder %s15, 0
    %p119 = por %p117, %p118
    %p120 = scmp.ne.s32.totalorder %s112, %s114
    %p121 = scmp.eq.s32.totalorder %s20, 2
    %p122 = por %p120, %p121
    %p123 = scmp.ne.s32.totalorder %s114, %s115
    %p124 = scmp.eq.s32.totalorder %s20, 0
    %p125 = por %p123, %p124
    %p126 = scmp.ne.s32.totalorder %s114, %s115
    %p127 = scmp.eq.s32.totalorder %s21, 2
    %p128 = por %p126, %p127
    %p130 = scmp.ne.s32.totalorder %s115, %s129
    %p131 = scmp.eq.s32.totalorder %s21, 0
    %p132 = por %p130, %p131
    %s134 = sadd.s32 %s133, 1
    %p137 = scmp.eq.s32.totalorder %s15, 2
    %p138 = scmp.ne.s32.totalorder %s133, %s135
    %p139 = scmp.eq.s32.totalorder %s15, 0
    %p140 = por %p138, %p139
    %p141 = scmp.ne.s32.totalorder %s133, %s135
    %p142 = scmp.eq.s32.totalorder %s20, 2
    %p143 = por %p141, %p142
    %p144 = scmp.ne.s32.totalorder %s135, %s136
    %p145 = scmp.eq.s32.totalorder %s20, 0
    %p146 = por %p144, %p145
    %p147 = scmp.ne.s32.totalorder %s135, %s136
    %p148 = scmp.eq.s32.totalorder %s21, 2
    %p149 = por %p147, %p148
    %p151 = scmp.ne.s32.totalorder %s136, %s150
    %p152 = scmp.eq.s32.totalorder %s21, 0
    %p153 = por %p151, %p152
    %s155 = sadd.s32 %s154, 1
    %p158 = scmp.eq.s32.totalorder %s15, 2
    %p159 = scmp.ne.s32.totalorder %s154, %s156
    %p160 = scmp.eq.s32.totalorder %s15, 0
    %p161 = por %p159, %p160
    %p162 = scmp.ne.s32.totalorder %s154, %s156
    %p163 = scmp.eq.s32.totalorder %s20, 2
    %p164 = por %p162, %p163
    %p165 = scmp.ne.s32.totalorder %s156, %s157
    %p166 = scmp.eq.s32.totalorder %s20, 0
    %p167 = por %p165, %p166
    %p168 = scmp.ne.s32.totalorder %s156, %s157
    %p169 = scmp.eq.s32.totalorder %s21, 2
    %p170 = por %p168, %p169
    %p172 = scmp.ne.s32.totalorder %s157, %s171
    %p173 = scmp.eq.s32.totalorder %s21, 0
    %p174 = por %p172, %p173
    %s175 = ssub.s32 %s15, %s22
    %p176 = scmp.eq.s32.totalorder %s175, 0
    %s178 = sadd.s32 %s177, 1
    %s179 = scalar_select %p176, %s177, %s178
    %p182 = pneg %p176
    %p183 = scmp.eq.s32.totalorder %s15, 2
    %p184 = por %p182, %p183
    %p185 = scmp.ne.s32.totalorder %s177, %s180
    %p186 = scmp.eq.s32.totalorder %s15, 0
    %p187 = por %p185, %p186
    %p188 = scmp.ne.s32.totalorder %s177, %s180
    %p189 = scmp.eq.s32.totalorder %s20, 2
    %p190 = por %p188, %p189
    %p191 = scmp.ne.s32.totalorder %s180, %s181
    %p192 = scmp.eq.s32.totalorder %s20, 0
    %p193 = por %p191, %p192
    %p194 = scmp.ne.s32.totalorder %s180, %s181
    %p195 = scmp.eq.s32.totalorder %s21, 2
    %p196 = por %p194, %p195
    %p198 = scmp.ne.s32.totalorder %s181, %s197
    %p199 = scmp.eq.s32.totalorder %s21, 0
    %p200 = por %p198, %p199
    %p201 = scmp.le.s32.totalorder 1, %s15
    %p202 = scmp.lt.s32.totalorder %s15, 4
    %p203 = pnand %p201, %p202
    %p204 = pneg %p203
    // Predicated region
    $region9: #{tpu_custom_call.1} parent=5 // pred_check
      _
    $region10: #{tpu_custom_call.1} parent=5 // pred_check_branch
      %206 = sbr.rel (%p203) target = $region12
    $region11: #{tpu_custom_call.1} parent=5 // pred_region
      %s207 = ssub.s32 %s15, 1
      // Predicated region
      $region13: #{tpu_custom_call.1} parent=11 // pred_check
        %p208 = pneg %p62
      $region14: #{tpu_custom_call.1} parent=11 // pred_check_branch
        %210 = sbr.rel (%p208) target = $region16
      $region15: #{tpu_custom_call.1} parent=11 // pred_region
        _
      $region16: #{tpu_custom_call.1} parent=11 // pred_fallthru
        _
      // Predicated region
      $region17: #{tpu_custom_call.1} parent=11 // pred_check
        %p211 = pneg %p83
      $region18: #{tpu_custom_call.1} parent=11 // pred_check_branch
        %213 = sbr.rel (%p211) target = $region20
      $region19: #{tpu_custom_call.1} parent=11 // pred_region
        _
      $region20: #{tpu_custom_call.1} parent=11 // pred_fallthru
        _
      // Predicated region
      $region21: #{tpu_custom_call.1} parent=11 // pred_check
        %p214 = pneg %p104
      $region22: #{tpu_custom_call.1} parent=11 // pred_check_branch
        %216 = sbr.rel (%p214) target = $region24
      $region23: #{tpu_custom_call.1} parent=11 // pred_region
        _
      $region24: #{tpu_custom_call.1} parent=11 // pred_fallthru
        _
      // Predicated region
      $region25: #{tpu_custom_call.1} parent=11 // pred_check
        %p217 = pneg %p125
      $region26: #{tpu_custom_call.1} parent=11 // pred_check_branch
        %219 = sbr.rel (%p217) target = $region28
      $region27: #{tpu_custom_call.1} parent=11 // pred_region
        _
      $region28: #{tpu_custom_call.1} parent=11 // pred_fallthru
        _
      // Predicated region
      $region29: #{tpu_custom_call.1} parent=11 // pred_check
        %p220 = pneg %p146
      $region30: #{tpu_custom_call.1} parent=11 // pred_check_branch
        %222 = sbr.rel (%p220) target = $region32
      $region31: #{tpu_custom_call.1} parent=11 // pred_region
        _
      $region32: #{tpu_custom_call.1} parent=11 // pred_fallthru
        _
      // Predicated region
      $region33: #{tpu_custom_call.1} parent=11 // pred_check
        %p223 = pneg %p167
      $region34: #{tpu_custom_call.1} parent=11 // pred_check_branch
        %225 = sbr.rel (%p223) target = $region36
      $region35: #{tpu_custom_call.1} parent=11 // pred_region
        _
      $region36: #{tpu_custom_call.1} parent=11 // pred_fallthru
        _
    $region12: #{tpu_custom_call.1} parent=5 // pred_fallthru
      _
    %p226 = scmp.lt.s32.totalorder %s15, 3
    // Predicated region
    $region37: #{tpu_custom_call.1} parent=5 // pred_check
      %p227 = pneg %p226
    $region38: #{tpu_custom_call.1} parent=5 // pred_check_branch
      %229 = sbr.rel (%p227) target = $region40
    $region39: #{tpu_custom_call.1} parent=5 // pred_region
      // Predicated region
      $region41: #{tpu_custom_call.1} parent=39 // pred_check
        %p230 = pneg %p35
      $region42: #{tpu_custom_call.1} parent=39 // pred_check_branch
        %232 = sbr.rel (%p230) target = $region44
      $region43: #{tpu_custom_call.1} parent=39 // pred_region
        %s233 = smul.u32 16, %s15
        %p234 = scmp.lt.s32.totalorder %s233, 47
        %s235 = scalar_select %p234, %s233, 47
        %s236 = smul.addr %s235, 8
        %s237 = scalar_lea.vmem %s0, %s236
        %s238 = smul.u32 16, %s15
      $region44: #{tpu_custom_call.1} parent=39 // pred_fallthru
        _
    $region40: #{tpu_custom_call.1} parent=5 // pred_fallthru
      _
    %p239 = scmp.le.s32.totalorder 1, %s15
    %p240 = scmp.lt.s32.totalorder %s15, 4
    %p241 = pnand %p239, %p240
    %p242 = pneg %p241
    // Predicated region
    $region45: #{tpu_custom_call.1} parent=5 // pred_check
      _
    $region46: #{tpu_custom_call.1} parent=5 // pred_check_branch
      %244 = sbr.rel (%p241) target = $region48
    $region47: #{tpu_custom_call.1} parent=5 // pred_region
      %s245 = ssub.s32 %s15, 1
      %s246 = smul.u32 16, %s20
      %p247 = scmp.lt.s32.totalorder %s246, 47
      %s248 = scalar_select %p247, %s246, 47
      %s249 = smul.addr %s248, 8
      %s250 = scalar_lea.vmem %s0, %s249
      %p251 = pneg %p41
      %p252 = pneg %p38
      %p253 = pneg %p62
      %p254 = pneg %p59
      %p255 = pneg %p83
      %p256 = pneg %p80
      %p257 = pneg %p104
      %p258 = pneg %p101
      %p259 = pneg %p125
      %p260 = pneg %p122
      %p261 = pneg %p146
      %p262 = pneg %p143
      %p263 = pneg %p167
      %p264 = pneg %p164
      %p265 = pneg %p193
      %p266 = pneg %p190
      %s267 = smul.u32 16, %s20
      %p268 = scmp.lt.s32.totalorder %s267, 47
      %s269 = scalar_select %p268, %s267, 47
      %s270 = smul.addr %s269, 8
      %s271 = scalar_lea.vmem %s7, %s270
      %s272 = smul.u32 16, %s20
      %p273 = scmp.lt.s32.totalorder %s272, 47
      %s274 = scalar_select %p273, %s272, 47
      %s275 = smul.addr %s274, 8
      %s276 = scalar_lea.vmem %s0, %s275
      %s277 = smul.u32 16, %s20
      %s278 = smul.u32 16, %s20
      %p279 = scmp.lt.s32.totalorder %s278, 47
      %s280 = scalar_select %p279, %s278, 47
      %s281 = smul.addr %s280, 8
      %s282 = scalar_lea.vmem %s7, %s281
      %s283 = smul.u32 16, %s20
      %v284 = vld [vmem:[%s276] sm:$0xff]
      %v285 = vld [vmem:[%s276 + $0x8] sm:$0xff]
      %v286 = vld [vmem:[%s276 + $0x10] sm:$0xff]
      %v287 = vld [vmem:[%s276 + $0x18] sm:$0xff]
      %v288 = vld [vmem:[%s276 + $0x20] sm:$0xff]
      %v289 = vld [vmem:[%s276 + $0x28] sm:$0xff]
      %v290 = vld [vmem:[%s276 + $0x30] sm:$0xff]
      %v291 = vld [vmem:[%s276 + $0x38] sm:$0xff]
      %v292 = vld [vmem:[%s276 + $0x40] sm:$0xff]
      %v293 = vld [vmem:[%s276 + $0x48] sm:$0xff]
      %v294 = vld [vmem:[%s276 + $0x50] sm:$0xff]
      %v295 = vld [vmem:[%s276 + $0x58] sm:$0xff]
      %v296 = vld [vmem:[%s276 + $0x60] sm:$0xff]
      %v297 = vld [vmem:[%s276 + $0x68] sm:$0xff]
      %v298 = vld [vmem:[%s276 + $0x70] sm:$0xff]
      %v299 = vld [vmem:[%s276 + $0x78] sm:$0xff]
      %v300 = vld [vmem:[%s1] sm:$0xff]
      %v301 = vld [vmem:[%s1 + $0x8] sm:$0xff]
      %v302 = vld [vmem:[%s2] sm:$0x1]
      %v304 = vperm.slane %v302, 0
      %vm306 = vcmask 130048
      %v308 = vsel %vm306, %v284, 0
      %v311 = vsel %vm306, %v285, 0
      %v314 = vsel %vm306, %v286, 0
      %v317 = vsel %vm306, %v287, 0
      %v320 = vsel %vm306, %v288, 0
      %v323 = vsel %vm306, %v289, 0
      %v326 = vsel %vm306, %v290, 0
      %v329 = vsel %vm306, %v291, 0
      %v332 = vsel %vm306, %v292, 0
      %v335 = vsel %vm306, %v293, 0
      %v338 = vsel %vm306, %v294, 0
      %v341 = vsel %vm306, %v295, 0
      %v344 = vsel %vm306, %v296, 0
      %v347 = vsel %vm306, %v297, 0
      %v350 = vsel %vm306, %v298, 0
      %v353 = vsel %vm306, %v299, 0
      %355 = vmatpush.msra.mxu0 0.0
      %356 = vmatpush.msra.mxu0 0.0
      %357 = vmatpush.msra.mxu0 0.0
      %358 = vmatpush.msra.mxu0 0.0
      %359 = vmatpush.msra.mxu0 0.0
      %360 = vmatpush.msra.mxu0 0.0
      %361 = vmatpush.msra.mxu0 0.0
      %362 = vmatpush.msra.mxu0 0.0
      %363 = vmatpush.msra.mxu0 0.0
      %364 = vmatpush.msra.mxu0 0.0
      %365 = vmatpush.msra.mxu0 0.0
      %366 = vmatpush.msra.mxu0 0.0
      %367 = vmatpush.msra.mxu0 0.0
      %368 = vmatpush.msra.mxu0 0.0
      %369 = vmatpush.msra.mxu0 %v301
      %370 = vmatpush.msra.mxu0 %v300
      %371 = vmatmul.f32.gmra.mxu0 %v308
      %v372 = vpop.f32.mrf.mxu0
      %v373 = vadd.f32 %v304, %v372
      %374 = vmatmul.f32.gmra.mxu0 %v311
      %v375 = vpop.f32.mrf.mxu0
      %v376 = vadd.f32 %v304, %v375
      %377 = vmatmul.f32.gmra.mxu0 %v314
      %v378 = vpop.f32.mrf.mxu0
      %v379 = vadd.f32 %v304, %v378
      %380 = vmatmul.f32.gmra.mxu0 %v317
      %v381 = vpop.f32.mrf.mxu0
      %v382 = vadd.f32 %v304, %v381
      %383 = vmatmul.f32.gmra.mxu0 %v320
      %v384 = vpop.f32.mrf.mxu0
      %v385 = vadd.f32 %v304, %v384
      %386 = vmatmul.f32.gmra.mxu0 %v323
      %v387 = vpop.f32.mrf.mxu0
      %v388 = vadd.f32 %v304, %v387
      %389 = vmatmul.f32.gmra.mxu0 %v326
      %v390 = vpop.f32.mrf.mxu0
      %v391 = vadd.f32 %v304, %v390
      %392 = vmatmul.f32.gmra.mxu0 %v329
      %v393 = vpop.f32.mrf.mxu0
      %v394 = vadd.f32 %v304, %v393
      %395 = vmatmul.f32.gmra.mxu0 %v332
      %v396 = vpop.f32.mrf.mxu0
      %v397 = vadd.f32 %v304, %v396
      %398 = vmatmul.f32.gmra.mxu0 %v335
      %v399 = vpop.f32.mrf.mxu0
      %v400 = vadd.f32 %v304, %v399
      %401 = vmatmul.f32.gmra.mxu0 %v338
      %v402 = vpop.f32.mrf.mxu0
      %v403 = vadd.f32 %v304, %v402
      %404 = vmatmul.f32.gmra.mxu0 %v341
      %v405 = vpop.f32.mrf.mxu0
      %v406 = vadd.f32 %v304, %v405
      %407 = vmatmul.f32.gmra.mxu0 %v344
      %v408 = vpop.f32.mrf.mxu0
      %v409 = vadd.f32 %v304, %v408
      %410 = vmatmul.f32.gmra.mxu0 %v347
      %v411 = vpop.f32.mrf.mxu0
      %v412 = vadd.f32 %v304, %v411
      %413 = vmatmul.f32.gmra.mxu0 %v350
      %v414 = vpop.f32.mrf.mxu0
      %v415 = vadd.f32 %v304, %v414
      %416 = vmatmul.f32.gmra.mxu0 %v353
      %v417 = vpop.f32.mrf.mxu0
      %v418 = vadd.f32 %v304, %v417
      %419 = vdwg.mxu0
      %v420 = vtanh.pop %v373
      %v421 = vtanh.pop %v376
      %v422 = vtanh.pop %v379
      %v423 = vtanh.pop %v382
      %v424 = vtanh.pop %v385
      %v425 = vtanh.pop %v388
      %v426 = vtanh.pop %v391
      %v427 = vtanh.pop %v394
      %v428 = vtanh.pop %v397
      %v429 = vtanh.pop %v400
      %v430 = vtanh.pop %v403
      %v431 = vtanh.pop %v406
      %v432 = vtanh.pop %v409
      %v433 = vtanh.pop %v412
      %v434 = vtanh.pop %v415
      %v435 = vtanh.pop %v418
      %v436 = vld [vmem:[%s3] sm:$0xff]
      %v437 = vld [vmem:[%s3 + $0x8] sm:$0xff]
      %v438 = vld [vmem:[%s3 + $0x10] sm:$0xff]
      %v439 = vld [vmem:[%s3 + $0x18] sm:$0xff]
      %v440 = vld [vmem:[%s3 + $0x20] sm:$0xff]
      %v441 = vld [vmem:[%s3 + $0x28] sm:$0xff]
      %v442 = vld [vmem:[%s3 + $0x30] sm:$0xff]
      %v443 = vld [vmem:[%s3 + $0x38] sm:$0xff]
      %v444 = vld [vmem:[%s3 + $0x40] sm:$0xff]
      %v445 = vld [vmem:[%s3 + $0x48] sm:$0xff]
      %v446 = vld [vmem:[%s3 + $0x50] sm:$0xff]
      %v447 = vld [vmem:[%s3 + $0x58] sm:$0xff]
      %v448 = vld [vmem:[%s3 + $0x60] sm:$0xff]
      %v449 = vld [vmem:[%s3 + $0x68] sm:$0xff]
      %v450 = vld [vmem:[%s3 + $0x70] sm:$0xff]
      %v451 = vld [vmem:[%s3 + $0x78] sm:$0xff]
      %v452 = vld [vmem:[%s4] sm:$0x1]
      %v454 = vperm.slane %v452, 0
      %456 = vmatpush.msra.mxu0 %v451
      %457 = vmatpush.msra.mxu0 %v450
      %458 = vmatpush.msra.mxu0 %v449
      %459 = vmatpush.msra.mxu0 %v448
      %460 = vmatpush.msra.mxu0 %v447
      %461 = vmatpush.msra.mxu0 %v446
      %462 = vmatpush.msra.mxu0 %v445
      %463 = vmatpush.msra.mxu0 %v444
      %464 = vmatpush.msra.mxu0 %v443
      %465 = vmatpush.msra.mxu0 %v442
      %466 = vmatpush.msra.mxu0 %v441
      %467 = vmatpush.msra.mxu0 %v440
      %468 = vmatpush.msra.mxu0 %v439
      %469 = vmatpush.msra.mxu0 %v438
      %470 = vmatpush.msra.mxu0 %v437
      %471 = vmatpush.msra.mxu0 %v436
      %472 = vmatmul.f32.gmra.mxu0 %v420
      %v473 = vpop.f32.mrf.mxu0
      %v474 = vadd.f32 %v454, %v473
      %475 = vmatmul.f32.gmra.mxu0 %v421
      %v476 = vpop.f32.mrf.mxu0
      %v477 = vadd.f32 %v454, %v476
      %478 = vmatmul.f32.gmra.mxu0 %v422
      %v479 = vpop.f32.mrf.mxu0
      %v480 = vadd.f32 %v454, %v479
      %481 = vmatmul.f32.gmra.mxu0 %v423
      %v482 = vpop.f32.mrf.mxu0
      %v483 = vadd.f32 %v454, %v482
      %484 = vmatmul.f32.gmra.mxu0 %v424
      %v485 = vpop.f32.mrf.mxu0
      %v486 = vadd.f32 %v454, %v485
      %487 = vmatmul.f32.gmra.mxu0 %v425
      %v488 = vpop.f32.mrf.mxu0
      %v489 = vadd.f32 %v454, %v488
      %490 = vmatmul.f32.gmra.mxu0 %v426
      %v491 = vpop.f32.mrf.mxu0
      %v492 = vadd.f32 %v454, %v491
      %493 = vmatmul.f32.gmra.mxu0 %v427
      %v494 = vpop.f32.mrf.mxu0
      %v495 = vadd.f32 %v454, %v494
      %496 = vmatmul.f32.gmra.mxu0 %v428
      %v497 = vpop.f32.mrf.mxu0
      %v498 = vadd.f32 %v454, %v497
      %499 = vmatmul.f32.gmra.mxu0 %v429
      %v500 = vpop.f32.mrf.mxu0
      %v501 = vadd.f32 %v454, %v500
      %502 = vmatmul.f32.gmra.mxu0 %v430
      %v503 = vpop.f32.mrf.mxu0
      %v504 = vadd.f32 %v454, %v503
      %505 = vmatmul.f32.gmra.mxu0 %v431
      %v506 = vpop.f32.mrf.mxu0
      %v507 = vadd.f32 %v454, %v506
      %508 = vmatmul.f32.gmra.mxu0 %v432
      %v509 = vpop.f32.mrf.mxu0
      %v510 = vadd.f32 %v454, %v509
      %511 = vmatmul.f32.gmra.mxu0 %v433
      %v512 = vpop.f32.mrf.mxu0
      %v513 = vadd.f32 %v454, %v512
      %514 = vmatmul.f32.gmra.mxu0 %v434
      %v515 = vpop.f32.mrf.mxu0
      %v516 = vadd.f32 %v454, %v515
      %517 = vmatmul.f32.gmra.mxu0 %v435
      %v518 = vpop.f32.mrf.mxu0
      %v519 = vadd.f32 %v454, %v518
      %520 = vdwg.mxu0
      %v521 = vtanh.pop %v474
      %v522 = vtanh.pop %v477
      %v523 = vtanh.pop %v480
      %v524 = vtanh.pop %v483
      %v525 = vtanh.pop %v486
      %v526 = vtanh.pop %v489
      %v527 = vtanh.pop %v492
      %v528 = vtanh.pop %v495
      %v529 = vtanh.pop %v498
      %v530 = vtanh.pop %v501
      %v531 = vtanh.pop %v504
      %v532 = vtanh.pop %v507
      %v533 = vtanh.pop %v510
      %v534 = vtanh.pop %v513
      %v535 = vtanh.pop %v516
      %v536 = vtanh.pop %v519
      %v537 = vld [vmem:[%s5] sm:$0x1]
      %v539 = vperm.slane %v537, 0
      %v541 = vmul.f32 %v521, %v539
      %v542 = vmul.f32 %v522, %v539
      %v543 = vmul.f32 %v523, %v539
      %v544 = vmul.f32 %v524, %v539
      %v545 = vmul.f32 %v525, %v539
      %v546 = vmul.f32 %v526, %v539
      %v547 = vmul.f32 %v527, %v539
      %v548 = vmul.f32 %v528, %v539
      %v549 = vmul.f32 %v529, %v539
      %v550 = vmul.f32 %v530, %v539
      %v551 = vmul.f32 %v531, %v539
      %v552 = vmul.f32 %v532, %v539
      %v553 = vmul.f32 %v533, %v539
      %v554 = vmul.f32 %v534, %v539
      %v555 = vmul.f32 %v535, %v539
      %v556 = vmul.f32 %v536, %v539
      %557 = vadd.xlane.f32.xlu0 %v541
      %v558 = vpop.xlane.xlu0 %557
      %559 = vadd.xlane.f32.xlu0 %v542
      %v560 = vpop.xlane.xlu0 %559
      %561 = vadd.xlane.f32.xlu0 %v543
      %v562 = vpop.xlane.xlu0 %561
      %563 = vadd.xlane.f32.xlu0 %v544
      %v564 = vpop.xlane.xlu0 %563
      %565 = vadd.xlane.f32.xlu0 %v545
      %v566 = vpop.xlane.xlu0 %565
      %567 = vadd.xlane.f32.xlu0 %v546
      %v568 = vpop.xlane.xlu0 %567
      %569 = vadd.xlane.f32.xlu0 %v547
      %v570 = vpop.xlane.xlu0 %569
      %571 = vadd.xlane.f32.xlu0 %v548
      %v572 = vpop.xlane.xlu0 %571
      %573 = vadd.xlane.f32.xlu0 %v549
      %v574 = vpop.xlane.xlu0 %573
      %575 = vadd.xlane.f32.xlu0 %v550
      %v576 = vpop.xlane.xlu0 %575
      %577 = vadd.xlane.f32.xlu0 %v551
      %v578 = vpop.xlane.xlu0 %577
      %579 = vadd.xlane.f32.xlu0 %v552
      %v580 = vpop.xlane.xlu0 %579
      %581 = vadd.xlane.f32.xlu0 %v553
      %v582 = vpop.xlane.xlu0 %581
      %583 = vadd.xlane.f32.xlu0 %v554
      %v584 = vpop.xlane.xlu0 %583
      %585 = vadd.xlane.f32.xlu0 %v555
      %v586 = vpop.xlane.xlu0 %585
      %587 = vadd.xlane.f32.xlu0 %v556
      %v588 = vpop.xlane.xlu0 %587
      %v589 = vld [vmem:[#allocation2] sm:$0x1]
      %v591 = vperm.slane %v589, 0
      %v593 = vadd.f32 %v558, %v591
      %v594 = vadd.f32 %v560, %v591
      %v595 = vadd.f32 %v562, %v591
      %v596 = vadd.f32 %v564, %v591
      %v597 = vadd.f32 %v566, %v591
      %v598 = vadd.f32 %v568, %v591
      %v599 = vadd.f32 %v570, %v591
      %v600 = vadd.f32 %v572, %v591
      %v601 = vadd.f32 %v574, %v591
      %v602 = vadd.f32 %v576, %v591
      %v603 = vadd.f32 %v578, %v591
      %v604 = vadd.f32 %v580, %v591
      %v605 = vadd.f32 %v582, %v591
      %v606 = vadd.f32 %v584, %v591
      %v607 = vadd.f32 %v586, %v591
      %v608 = vadd.f32 %v588, %v591
      %vm609 = vcmask 7168
      %610 = vst.msk [vmem:[%s282] sm:$0xff] %vm609, %v593
      %611 = vst.msk [vmem:[%s282 + $0x8] sm:$0xff] %vm609, %v594
      %612 = vst.msk [vmem:[%s282 + $0x10] sm:$0xff] %vm609, %v595
      %613 = vst.msk [vmem:[%s282 + $0x18] sm:$0xff] %vm609, %v596
      %614 = vst.msk [vmem:[%s282 + $0x20] sm:$0xff] %vm609, %v597
      %615 = vst.msk [vmem:[%s282 + $0x28] sm:$0xff] %vm609, %v598
      %616 = vst.msk [vmem:[%s282 + $0x30] sm:$0xff] %vm609, %v599
      %617 = vst.msk [vmem:[%s282 + $0x38] sm:$0xff] %vm609, %v600
      %618 = vst.msk [vmem:[%s282 + $0x40] sm:$0xff] %vm609, %v601
      %619 = vst.msk [vmem:[%s282 + $0x48] sm:$0xff] %vm609, %v602
      %620 = vst.msk [vmem:[%s282 + $0x50] sm:$0xff] %vm609, %v603
      %621 = vst.msk [vmem:[%s282 + $0x58] sm:$0xff] %vm609, %v604
      %622 = vst.msk [vmem:[%s282 + $0x60] sm:$0xff] %vm609, %v605
      %623 = vst.msk [vmem:[%s282 + $0x68] sm:$0xff] %vm609, %v606
      %624 = vst.msk [vmem:[%s282 + $0x70] sm:$0xff] %vm609, %v607
      %625 = vst.msk [vmem:[%s282 + $0x78] sm:$0xff] %vm609, %v608
      %s626 = smul.u32 16, %s20
      %p627 = scmp.lt.s32.totalorder %s626, 47
      %s628 = scalar_select %p627, %s626, 47
      %s629 = smul.addr %s628, 8
      %s630 = scalar_lea.vmem %s7, %s629
      // Predicated region
      $region49: #{tpu_custom_call.1} parent=47 // pred_check
        %p631 = pneg %p190
      $region50: #{tpu_custom_call.1} parent=47 // pred_check_branch
        %633 = sbr.rel (%p631) target = $region52
      $region51: #{tpu_custom_call.1} parent=47 // pred_region
        %s634 = smul.u32 16, %s20
      $region52: #{tpu_custom_call.1} parent=47 // pred_fallthru
        _
    $region48: #{tpu_custom_call.1} parent=5 // pred_fallthru
      _
    %p635 = scmp.le.s32.totalorder 2, %s15
    // Predicated region
    $region53: #{tpu_custom_call.1} parent=5 // pred_check
      %p636 = pneg %p635
    $region54: #{tpu_custom_call.1} parent=5 // pred_check_branch
      %638 = sbr.rel (%p636) target = $region56
    $region55: #{tpu_custom_call.1} parent=5 // pred_region
      %s639 = ssub.s32 %s15, 2
      // Predicated region
      $region57: #{tpu_custom_call.1} parent=55 // pred_check
        %p640 = pneg %p196
      $region58: #{tpu_custom_call.1} parent=55 // pred_check_branch
        %642 = sbr.rel (%p640) target = $region60
      $region59: #{tpu_custom_call.1} parent=55 // pred_region
        %s643 = smul.u32 16, %s21
        %p644 = scmp.lt.s32.totalorder %s643, 47
        %s645 = scalar_select %p644, %s643, 47
        %s646 = smul.addr %s645, 8
        %s647 = scalar_lea.vmem %s7, %s646
      $region60: #{tpu_custom_call.1} parent=55 // pred_fallthru
        _
    $region56: #{tpu_custom_call.1} parent=5 // pred_fallthru
      _
  $region6: #{tpu_custom_call.1} parent=0 // loop_footer
    %s19 = sadd.s32 1, %s15
  $region7: #{tpu_custom_call.1} parent=0 // loop_footer_branch
    %14 = sbr.rel target = $region3
  $region8: #{tpu_custom_call.1} parent=0 // loop_exit
    _

</llo_original>
